<compile_context>
chip_gen: v6e
topology: v6e:2x2x1
jax: 0.10.0
libtpu: 0.0.40
codegen_flags: <defaults>
</compile_context>

<pallas_src>
import functools

import jax
import jax.numpy as jnp
from jax import lax
from jax.experimental import pallas as pl
from jax.experimental.pallas import tpu as pltpu


# ----------------------------- activations ----------------------------------
_ACTS = {
    "relu": lambda x: jnp.maximum(x, 0.0),
    "tanh": jnp.tanh,
    "sigmoid": jax.nn.sigmoid,
    "elu": jax.nn.elu,
    "selu": jax.nn.selu,
    "linear": lambda x: x,
}


def _round_up(x, m):
    return ((x + m - 1) // m) * m


# ------------------------------ fused Pallas kernel ---------------------------
def _decoder_kernel(*refs, n_hidden, acts, include_temp):
    """Fused decoder forward for one lane-dense output-column tile.

    refs = (z, w0, b0, ..., w_{n-1}, b_{n-1}, W_out_tile, b_out_tile, [scale], out)
      z      : (M, z_dim)      resident (constant index map)
      w_i    : (K_i, H_i)      NN layout, resident
      b_i    : (1, H_i)        resident
      W_out  : (H_last, tn)    streamed tile, lane-major along L*A
      b_out  : (1, tn)         streamed tile
      scale  : (1,) in SMEM    softplus(temperature), precomputed in wrapper
      out    : (M, tn)         lane-dense output tile

    The tiny hidden stack is recomputed every grid step: it is <1% of FLOPs,
    hides under the W_out tile DMA, and stays correct when the "parallel"
    output axis is split across TensorCores (v7x megacore).
    """
    it = iter(refs)
    z_ref = next(it)
    hidden = [(next(it), next(it)) for _ in range(n_hidden)]
    wout_ref = next(it)
    bout_ref = next(it)
    scale_ref = next(it) if include_temp else None
    o_ref = next(it)

    # Hidden layers: act(x @ W_i + b_i); intermediates stay in vregs/VMEM.
    x = z_ref[...]
    for i, (w_ref, b_ref) in enumerate(hidden):
        y = jnp.dot(x, w_ref[...], preferred_element_type=jnp.float32)
        x = _ACTS[acts[i]](y + b_ref[...])

    # Final big linear on this output-column tile (bf16 streaming: one cast of
    # the tiny activation; f32 accumulation either way).
    x = x.astype(wout_ref.dtype)
    y = jnp.dot(x, wout_ref[...], preferred_element_type=jnp.float32)
    y = y + bout_ref[...]

    if include_temp:
        y = y * scale_ref[0]          # SMEM scalar broadcast multiply

    o_ref[...] = y.astype(o_ref.dtype)


# -------------------------- parameter construction ---------------------------
def init_params(key, cfg):
    """Deterministic synthetic init mirroring the PyTorch __init__ shapes."""
    H = cfg["hidden_layers_sizes"]
    zd, L, A = cfg["z_dim"], cfg["seq_len"], cfg["alphabet_size"]
    C = cfg["convolution_output_depth"] if cfg["convolve_output"] else A
    mu_bias_init, logvar_init = 0.1, -10.0

    p = {}
    keys = jax.random.split(key, len(H) + 2)
    in_dim = zd
    for i, h in enumerate(H):
        bound = 1.0 / float(in_dim) ** 0.5
        p[f"hid{i}_w_mean"] = jax.random.uniform(
            keys[i], (h, in_dim), jnp.float32, -bound, bound)
        p[f"hid{i}_w_logvar"] = jnp.full((h, in_dim), logvar_init, jnp.float32)
        p[f"hid{i}_b_mean"] = jnp.full((h,), mu_bias_init, jnp.float32)
        p[f"hid{i}_b_logvar"] = jnp.full((h,), logvar_init, jnp.float32)
        in_dim = h

    std = (2.0 / (C * L + H[-1])) ** 0.5  # xavier normal
    p["last_w_mean"] = std * jax.random.normal(keys[len(H)], (C * L, H[-1]), jnp.float32)
    p["last_w_logvar"] = jnp.full((C * L, H[-1]), logvar_init, jnp.float32)
    p["last_b_mean"] = jnp.full((A * L,), mu_bias_init, jnp.float32)
    p["last_b_logvar"] = jnp.full((A * L,), logvar_init, jnp.float32)

    if cfg["convolve_output"]:
        cb = 1.0 / float(C) ** 0.5
        p["conv_w_mean"] = jax.random.uniform(
            keys[len(H) + 1], (A, C, 1), jnp.float32, -cb, cb)
        p["conv_w_logvar"] = jnp.full((A, C, 1), logvar_init, jnp.float32)
    if cfg["include_sparsity"]:
        s_shape = (H[-1] // cfg["num_tiles_sparsity"], L)
        p["sparsity_mean"] = jnp.zeros(s_shape, jnp.float32)
        p["sparsity_logvar"] = jnp.full(s_shape, logvar_init, jnp.float32)
    if cfg["include_temperature_scaler"]:
        p["temp_mean"] = jnp.ones((1,), jnp.float32)
        p["temp_logvar"] = jnp.full((1,), logvar_init, jnp.float32)
    return p


def sample_weights(params, key, cfg):
    """Reparametrization trick: w = exp(0.5*logvar)*eps + mean (Bayesian path)."""
    names = []
    for i in range(len(cfg["hidden_layers_sizes"])):
        names += [f"hid{i}_w", f"hid{i}_b"]
    names += ["last_w", "last_b"]
    if cfg["convolve_output"]:
        names.append("conv_w")
    if cfg["include_sparsity"]:
        names.append("sparsity")
    if cfg["include_temperature_scaler"]:
        names.append("temp")

    out = {}
    keys = jax.random.split(key, len(names))
    for n, k in zip(names, keys):
        mean, logvar = params[n + "_mean"], params[n + "_logvar"]
        if cfg["vae_decoder_bayesian"]:
            eps = jax.random.normal(k, mean.shape, mean.dtype)
            out[n] = jnp.exp(0.5 * logvar) * eps + mean
        else:
            out[n] = mean
    return out


# ------------------------- host-side weight prep (plain JAX) ------------------
def _build_W_out(w, cfg):
    """Conv-combine + sparsity gating on the output weight (weight prep, not
    activation math).  Raw row-major reshapes intentionally mirror torch .view
    semantics of the original module.  Returns the (L*A, H_last) matrix."""
    H = cfg["hidden_layers_sizes"]
    L, A = cfg["seq_len"], cfg["alphabet_size"]
    C = cfg["convolution_output_depth"] if cfg["convolve_output"] else A
    hi = lax.Precision.HIGHEST

    W_out = w["last_w"]                       # (C*L, H[-1])
    if cfg["convolve_output"]:
        W_out = jnp.dot(W_out.reshape(L * H[-1], C),
                        w["conv_w"].reshape(C, A), precision=hi)
    if cfg["include_sparsity"]:
        gate = jax.nn.sigmoid(
            jnp.tile(w["sparsity"], (cfg["num_tiles_sparsity"], 1)))[:, :, None]
        W_out = W_out.reshape(H[-1], L, A) * gate
    return W_out.reshape(L * A, H[-1])


def _vmem_limit_bytes(cfg, M, tn, wout_itemsize):
    """Raise the scoped-VMEM limit only when the chosen tiles require it."""
    H = cfg["hidden_layers_sizes"]
    f32 = 4
    resident = M * cfg["z_dim"] * f32
    k = cfg["z_dim"]
    for h in H:
        resident += (k * h + h) * f32
        k = h
    streamed = H[-1] * tn * wout_itemsize + tn * f32 + M * tn * f32
    need = 2 * resident + 2 * streamed            # double-buffered pipeline
    need = int(need * 1.5) + (1 << 20)            # headroom for compiler scratch
    return need if need > (16 << 20) else None    # below every generation's default


# ------------------------------ forward passes --------------------------------
def forward_pallas(w, z, cfg, *, stream_wout_bf16=False, max_tile_cols=512):
    """Full decoder forward as ONE pallas_call, gridded over output columns.

    max_tile_cols: lane-dense output-column tile width.  ~512 is safe for f32
    on v7x (64 MiB VMEM); 1024-2048 for v5e/v6e or bf16 streaming.
    """
    H = cfg["hidden_layers_sizes"]
    L, A = cfg["seq_len"], cfg["alphabet_size"]
    n = len(H)
    acts = tuple([cfg["first_hidden_nonlinearity"]] * (n - 1)
                 + [cfg["last_hidden_nonlinearity"]])
    include_temp = bool(cfg["include_temperature_scaler"])
    M, zd = z.shape
    H_last = H[-1]
    N = L * A

    # --- weight prep (plain JAX; fuses with Bayesian sampling under jit) -----
    W_out = _build_W_out(w, cfg).T            # (H_last, L*A): NN layout -> streamed
    b_out = w["last_b"].reshape(1, N)         #   dim lane-major, no in-kernel vxpose
    if stream_wout_bf16:
        W_out = W_out.astype(jnp.bfloat16)    # cast fuses with the gate multiply

    # Lane-dense tiling of the output columns (pad, slice back after the call).
    tn = min(_round_up(N, 128), _round_up(max_tile_cols, 128))
    NP = _round_up(N, tn)
    if NP != N:
        W_out = jnp.pad(W_out, ((0, 0), (0, NP - N)))
        b_out = jnp.pad(b_out, ((0, 0), (0, NP - N)))
    grid = (NP // tn,)

    args = [z]
    in_specs = [pl.BlockSpec((M, zd), lambda j: (0, 0))]          # resident
    for i in range(n):
        wi = w[f"hid{i}_w"].T                 # (K_i, H_i): NN layout, tiny
        bi = w[f"hid{i}_b"].reshape(1, H[i])
        args += [wi, bi]
        in_specs += [pl.BlockSpec(wi.shape, lambda j: (0, 0)),    # resident
                     pl.BlockSpec(bi.shape, lambda j: (0, 0))]    # resident
    args += [W_out, b_out]
    in_specs += [pl.BlockSpec((H_last, tn), lambda j: (0, j)),    # streamed
                 pl.BlockSpec((1, tn), lambda j: (0, j))]         # streamed
    if include_temp:
        # Softplus computed once in plain JAX (stable); scalar stays on SMEM path.
        args.append(jax.nn.softplus(w["temp"]).reshape(1).astype(jnp.float32))
        in_specs.append(pl.BlockSpec(memory_space=pltpu.MemorySpace.SMEM))

    out_specs = pl.BlockSpec((M, tn), lambda j: (0, j))

    cp_kwargs = dict(dimension_semantics=("parallel",))           # v7x: 2 TCs split grid
    vlim = _vmem_limit_bytes(cfg, M, tn, W_out.dtype.itemsize)
    if vlim is not None:
        cp_kwargs["vmem_limit_bytes"] = vlim

    kernel = functools.partial(_decoder_kernel,
                               n_hidden=n, acts=acts, include_temp=include_temp)
    out = pl.pallas_call(
        kernel,
        grid=grid,
        out_shape=jax.ShapeDtypeStruct((M, NP), jnp.float32),
        in_specs=in_specs,
        out_specs=out_specs,
        compiler_params=pltpu.CompilerParams(**cp_kwargs),
    )(*args)
    return out[:, :N]


def forward_ref(w, z, cfg):
    """Pure-JAX reference mirroring the PyTorch forward semantics."""
    H = cfg["hidden_layers_sizes"]
    L, A = cfg["seq_len"], cfg["alphabet_size"]
    n = len(H)
    hi = lax.Precision.HIGHEST

    x = z
    for i in range(n - 1):
        x = _ACTS[cfg["first_hidden_nonlinearity"]](
            jnp.dot(x, w[f"hid{i}_w"].T, precision=hi) + w[f"hid{i}_b"])
    x = _ACTS[cfg["last_hidden_nonlinearity"]](
        jnp.dot(x, w[f"hid{n-1}_w"].T, precision=hi) + w[f"hid{n-1}_b"])

    W_out, b_out = w["last_w"], w["last_b"]
    if cfg["convolve_output"]:
        C = cfg["convolution_output_depth"]
        W_out = jnp.dot(W_out.reshape(L * H[-1], C),
                        w["conv_w"].reshape(C, A), precision=hi)
    if cfg["include_sparsity"]:
        gate = jax.nn.sigmoid(
            jnp.tile(w["sparsity"], (cfg["num_tiles_sparsity"], 1)))[:, :, None]
        W_out = W_out.reshape(H[-1], L, A) * gate
    W_out = W_out.reshape(L * A, H[-1])
    x = jnp.dot(x, W_out.T, precision=hi) + b_out
    if cfg["include_temperature_scaler"]:
        x = jax.nn.softplus(w["temp"])[0] * x
    return x


# ---------------------------------- main --------------------------------------
if __name__ == "__main__":
    cfg = dict(
        seq_len=33,               # L*A = 330: exercises non-multiple-of-128 padding
        alphabet_size=10,
        hidden_layers_sizes=[32, 64],
        z_dim=8,
        first_hidden_nonlinearity="relu",
        last_hidden_nonlinearity="tanh",
        dropout_proba=0.0,
        convolve_output=True,
        convolution_output_depth=4,
        include_temperature_scaler=True,
        include_sparsity=True,
        num_tiles_sparsity=2,
        vae_decoder_bayesian=True,
    )

    root = jax.random.PRNGKey(0)
    k_param, k_sample, k_z = jax.random.split(root, 3)

    params = init_params(k_param, cfg)
    weights = sample_weights(params, k_sample, cfg)
    # Batch = 8 fills the f32 sublane minimum.
    z = jax.random.normal(k_z, (8, cfg["z_dim"]), jnp.float32)

    ref = forward_ref(weights, z, cfg)

    # f32 W_out stream; max_tile_cols=128 forces a 3-step output grid at this
    # small demo size so the pipelined/padded path is actually exercised.
    fwd_f32 = jax.jit(lambda w_, z_: forward_pallas(w_, z_, cfg, max_tile_cols=128))
    out = jax.block_until_ready(fwd_f32(weights, z))
    assert out.shape == ref.shape, out.shape
    assert bool(jnp.all(jnp.isfinite(out)))
    # Default MXU precision in-kernel vs HIGHEST-precision reference -> 1e-2.
    assert bool(jnp.allclose(out, ref, rtol=1e-2, atol=1e-2)), (
        float(jnp.max(jnp.abs(out - ref))))

    # bf16 W_out streaming with f32 accumulation (the big memory-bound win at scale).
    fwd_bf16 = jax.jit(lambda w_, z_: forward_pallas(
        w_, z_, cfg, stream_wout_bf16=True, max_tile_cols=128))
    out_bf16 = jax.block_until_ready(fwd_bf16(weights, z))
    assert bool(jnp.all(jnp.isfinite(out_bf16)))
    assert bool(jnp.allclose(out_bf16, ref, rtol=3e-2, atol=3e-2)), (
        float(jnp.max(jnp.abs(out_bf16 - ref))))

    print("KERNEL_OK")
</pallas_src>

<mosaic_0001>
module attributes {stable_mosaic.version = 11 : i64} {
  func.func @_decoder_kernel(%arg0: i32, %arg1: memref<8x8xf32, #tpu.memory_space<vmem>>, %arg2: memref<8x32xf32, #tpu.memory_space<vmem>>, %arg3: memref<1x32xf32, #tpu.memory_space<vmem>>, %arg4: memref<32x64xf32, #tpu.memory_space<vmem>>, %arg5: memref<1x64xf32, #tpu.memory_space<vmem>>, %arg6: memref<64x128xf32, #tpu.memory_space<vmem>>, %arg7: memref<1x128xf32, #tpu.memory_space<vmem>>, %arg8: memref<1xf32, #tpu.memory_space<smem>>, %arg9: memref<8x128xf32, #tpu.memory_space<vmem>>) attributes {dimension_semantics = [#tpu.dimension_semantics<parallel>], iteration_bounds = array<i64: 3>, scalar_prefetch = 0 : i64, scratch_operands = 0 : i64, tpu.core_type = #tpu.core_type<tc>, window_params = [{pipeline_mode = #tpu.pipeline_mode<synchronous>, transform_indices = @transform_0, window_bounds = array<i64: 8, 8>}, {pipeline_mode = #tpu.pipeline_mode<synchronous>, transform_indices = @transform_1, window_bounds = array<i64: 8, 32>}, {pipeline_mode = #tpu.pipeline_mode<synchronous>, transform_indices = @transform_2, window_bounds = array<i64: 1, 32>}, {pipeline_mode = #tpu.pipeline_mode<synchronous>, transform_indices = @transform_3, window_bounds = array<i64: 32, 64>}, {pipeline_mode = #tpu.pipeline_mode<synchronous>, transform_indices = @transform_4, window_bounds = array<i64: 1, 64>}, {transform_indices = @transform_5, window_bounds = array<i64: 64, 128>}, {transform_indices = @transform_6, window_bounds = array<i64: 1, 128>}, {transform_indices = @transform_7, window_bounds = array<i64: 1>}, {transform_indices = @transform_8, window_bounds = array<i64: 8, 128>}]} {
    %c0 = arith.constant 0 : index
    %c0_0 = arith.constant 0 : index
    %0 = vector.load %arg1[%c0, %c0_0] : memref<8x8xf32, #tpu.memory_space<vmem>>, vector<8x8xf32>
    %c0_1 = arith.constant 0 : index
    %c0_2 = arith.constant 0 : index
    %1 = vector.load %arg2[%c0_1, %c0_2] : memref<8x32xf32, #tpu.memory_space<vmem>>, vector<8x32xf32>
    %cst = arith.constant dense<0.000000e+00> : vector<8x32xf32>
    %2 = tpu.matmul %0, %1, %cst {dimension_numbers = #tpu.dot_dimension_numbers<[1], [0], [0], [1], [0, 0, 1, 1], [], []>} : vector<8x8xf32>, vector<8x32xf32>, vector<8x32xf32> -> vector<8x32xf32>
    %c0_3 = arith.constant 0 : index
    %c0_4 = arith.constant 0 : index
    %3 = vector.load %arg3[%c0_3, %c0_4] : memref<1x32xf32, #tpu.memory_space<vmem>>, vector<1x32xf32>
    %4 = vector.broadcast %3 : vector<1x32xf32> to vector<8x32xf32>
    %5 = arith.addf %2, %4 : vector<8x32xf32>
    %cst_5 = arith.constant 0.000000e+00 : f32
    %6 = vector.broadcast %cst_5 : f32 to vector<8x32xf32>
    %7 = arith.maximumf %5, %6 : vector<8x32xf32>
    %c0_6 = arith.constant 0 : index
    %c0_7 = arith.constant 0 : index
    %8 = vector.load %arg4[%c0_6, %c0_7] : memref<32x64xf32, #tpu.memory_space<vmem>>, vector<32x64xf32>
    %cst_8 = arith.constant dense<0.000000e+00> : vector<8x64xf32>
    %9 = tpu.matmul %7, %8, %cst_8 {dimension_numbers = #tpu.dot_dimension_numbers<[1], [0], [0], [1], [0, 0, 1, 1], [], []>} : vector<8x32xf32>, vector<32x64xf32>, vector<8x64xf32> -> vector<8x64xf32>
    %c0_9 = arith.constant 0 : index
    %c0_10 = arith.constant 0 : index
    %10 = vector.load %arg5[%c0_9, %c0_10] : memref<1x64xf32, #tpu.memory_space<vmem>>, vector<1x64xf32>
    %11 = vector.broadcast %10 : vector<1x64xf32> to vector<8x64xf32>
    %12 = arith.addf %9, %11 : vector<8x64xf32>
    %13 = math.tanh %12 : vector<8x64xf32>
    %c0_11 = arith.constant 0 : index
    %c0_12 = arith.constant 0 : index
    %14 = vector.load %arg6[%c0_11, %c0_12] : memref<64x128xf32, #tpu.memory_space<vmem>>, vector<64x128xf32>
    %cst_13 = arith.constant dense<0.000000e+00> : vector<8x128xf32>
    %15 = tpu.matmul %13, %14, %cst_13 {dimension_numbers = #tpu.dot_dimension_numbers<[1], [0], [0], [1], [0, 0, 1, 1], [], []>} : vector<8x64xf32>, vector<64x128xf32>, vector<8x128xf32> -> vector<8x128xf32>
    %c0_14 = arith.constant 0 : index
    %c0_15 = arith.constant 0 : index
    %16 = vector.load %arg7[%c0_14, %c0_15] : memref<1x128xf32, #tpu.memory_space<vmem>>, vector<1x128xf32>
    %17 = vector.broadcast %16 : vector<1x128xf32> to vector<8x128xf32>
    %18 = arith.addf %15, %17 : vector<8x128xf32>
    %c0_16 = arith.constant 0 : index
    %19 = memref.load %arg8[%c0_16] : memref<1xf32, #tpu.memory_space<smem>>
    %20 = vector.broadcast %19 : f32 to vector<8x128xf32>
    %21 = arith.mulf %18, %20 : vector<8x128xf32>
    %c0_17 = arith.constant 0 : index
    %c0_18 = arith.constant 0 : index
    %22 = vector.load %arg9[%c0_17, %c0_18] : memref<8x128xf32, #tpu.memory_space<vmem>>, vector<8x128xf32>
    tpu.vector_store %arg9[%c0_17, %c0_18], %21 {strides = array<i32>} : memref<8x128xf32, #tpu.memory_space<vmem>>, vector<8x128xf32>,
    return
  }
  func.func @transform_0(%arg0: i32) -> (i32, i32) {
    %c0_i32 = arith.constant 0 : i32
    %c0_i32_0 = arith.constant 0 : i32
    %c0_i32_1 = arith.constant 0 : i32
    return %c0_i32, %c0_i32_0 : i32, i32
  }
  func.func @transform_1(%arg0: i32) -> (i32, i32) {
    %c0_i32 = arith.constant 0 : i32
    %c0_i32_0 = arith.constant 0 : i32
    %c0_i32_1 = arith.constant 0 : i32
    return %c0_i32, %c0_i32_0 : i32, i32
  }
  func.func @transform_2(%arg0: i32) -> (i32, i32) {
    %c0_i32 = arith.constant 0 : i32
    %c0_i32_0 = arith.constant 0 : i32
    %c0_i32_1 = arith.constant 0 : i32
    return %c0_i32, %c0_i32_0 : i32, i32
  }
  func.func @transform_3(%arg0: i32) -> (i32, i32) {
    %c0_i32 = arith.constant 0 : i32
    %c0_i32_0 = arith.constant 0 : i32
    %c0_i32_1 = arith.constant 0 : i32
    return %c0_i32, %c0_i32_0 : i32, i32
  }
  func.func @transform_4(%arg0: i32) -> (i32, i32) {
    %c0_i32 = arith.constant 0 : i32
    %c0_i32_0 = arith.constant 0 : i32
    %c0_i32_1 = arith.constant 0 : i32
    return %c0_i32, %c0_i32_0 : i32, i32
  }
  func.func @transform_5(%arg0: i32) -> (i32, i32) {
    %c0_i32 = arith.constant 0 : i32
    %c0_i32_0 = arith.constant 0 : i32
    return %c0_i32, %arg0 : i32, i32
  }
  func.func @transform_6(%arg0: i32) -> (i32, i32) {
    %c0_i32 = arith.constant 0 : i32
    %c0_i32_0 = arith.constant 0 : i32
    return %c0_i32, %arg0 : i32, i32
  }
  func.func @transform_7(%arg0: i32) -> i32 {
    %c0_i32 = arith.constant 0 : i32
    %c0_i32_0 = arith.constant 0 : i32
    return %c0_i32 : i32
  }
  func.func @transform_8(%arg0: i32) -> (i32, i32) {
    %c0_i32 = arith.constant 0 : i32
    %c0_i32_0 = arith.constant 0 : i32
    return %c0_i32, %arg0 : i32, i32
  }
}

</mosaic_0001>

<llo_original>
// kernel: _lambda_.1
$region0: #{_lambda_.1}
  #allocation0 [shape = 'u32[]', space=smem, size = 0x4, offset = 0x4, fixed_abs, tag = 'smem constant byte address 0x4 - core index']
  #allocation1 [shape = 'u32[144,128]{1,0:T(1,128)}', space=vmem, size = 0x12000, scoped, tag = 'internal scratch']
  #allocation2 [shape = 'f32[1]{0:T(128)S(6)}', space=smem, size = 0x200, scoped, tag = 'scoped memory for _lambda_.1']
  %s0 = inlined_call_operand.vmem [shape: f32[8,8], index: 0, kind: input, shape index: {}]
  %s1 = inlined_call_operand.vmem [shape: f32[8,32], index: 1, kind: input, shape index: {}]
  %s2 = inlined_call_operand.vmem [shape: f32[1,32], index: 2, kind: input, shape index: {}]
  %s3 = inlined_call_operand.vmem [shape: f32[32,64], index: 3, kind: input, shape index: {}]
  %s4 = inlined_call_operand.vmem [shape: f32[1,64], index: 4, kind: input, shape index: {}]
  %s5 = inlined_call_operand.vmem [shape: f32[64,384], index: 5, kind: input, shape index: {}]
  %s6 = inlined_call_operand.vmem [shape: f32[1,384], index: 6, kind: input, shape index: {}]
  %s7 = inlined_call_operand.<no memory space> [shape: f32[1], index: 7, kind: input, shape index: {}]
  %s8 = inlined_call_operand.hbm [shape: f32[8,384], index: 8, kind: output, shape index: {}]
  %s9 = sld [smem:[#allocation0]]
  $region103: #{_lambda_.1} parent=0
    _
  %s11 = ssub.s32 1, %s9
  %s12 = scalar_select 0, %s11, %s9
  %13 = sst [smem:[#allocation2]] %s7
  $region1: #{_lambda_.1} parent=0
    #allocation3 [shape = 'u8[65536]{0}', space=vmem, size = 0x10000, scoped, tag = 'input window, operand 5']
    #allocation4 [shape = 'u8[8192]{0}', space=vmem, size = 0x2000, scoped, tag = 'output window, operand 0']
    #allocation5 [shape = 's32[2]{0}', space=sflag, size = 0x8, scoped, tag = 'scoped memory for _lambda_.1']
    %14 = vsyncpa [#allocation5], 0
    %s15 = scalar_lea.sflag [#allocation5], 1
    %16 = vsyncpa %s15, 0
    loop: start=0, step=1, limit=5
    $region2: #{_lambda_.1} parent=1 // loop_pre_header
      _
    $region3: #{_lambda_.1} parent=1 // loop_header
      %s18 = sphi 0, %s22
      %p19 = scmp.ge.s32.totalorder %s18, 5
      %s26 = sphi 0, %s26
      %s28 = sphi 0, %s26
      %s29 = sphi 0, %s28
      %s43 = sphi 0, %s29
      %s47 = sphi 0, %s47
      %s49 = sphi 0, %s47
      %s50 = sphi 0, %s49
      %s64 = sphi 0, %s50
      %s68 = sphi 0, %s68
      %s70 = sphi 0, %s68
      %s71 = sphi 0, %s70
      %s85 = sphi 0, %s71
      %s89 = sphi 0, %s89
      %s91 = sphi 0, %s89
      %s92 = sphi 0, %s91
      %s106 = sphi 0, %s92
      %s110 = sphi 0, %s110
      %s112 = sphi 0, %s110
      %s113 = sphi 0, %s112
      %s127 = sphi 0, %s113
      %s133 = sphi 0, %s135
      %s136 = sphi 0, %s133
      %s137 = sphi 0, %s136
      %s153 = sphi 0, %s137
      %s159 = sphi 0, %s161
      %s162 = sphi 0, %s159
      %s163 = sphi 0, %s162
      %s179 = sphi 0, %s163
      %s183 = sphi 0, %s183
      %s185 = sphi 0, %s183
      %s186 = sphi 0, %s185
      %s200 = sphi 0, %s186
      %s206 = sphi 0, %s208
      %s209 = sphi 0, %s206
      %s210 = sphi 0, %s209
      %s226 = sphi 0, %s210
    $region4: #{_lambda_.1} parent=1 // loop_header_branch
      %21 = sbr.rel (%p19) target = $region8
    $region5: #{_lambda_.1} parent=1 // loop_body
      %s23 = ssub.s32 %s18, 1
      %s24 = ssub.s32 %s18, 2
      %s25 = sadd.s32 %s18, 1
      %s27 = sadd.s32 %s26, 1
      %p30 = scmp.eq.s32.totalorder %s18, 2
      %p31 = scmp.ne.s32.totalorder %s26, %s28
      %p32 = scmp.eq.s32.totalorder %s18, 0
      %p33 = por %p31, %p32
      %p34 = scmp.ne.s32.totalorder %s26, %s28
      %p35 = scmp.eq.s32.totalorder %s23, 2
      %p36 = por %p34, %p35
      %p37 = scmp.ne.s32.totalorder %s28, %s29
      %p38 = scmp.eq.s32.totalorder %s23, 0
      %p39 = por %p37, %p38
      %p40 = scmp.ne.s32.totalorder %s28, %s29
      %p41 = scmp.eq.s32.totalorder %s24, 2
      %p42 = por %p40, %p41
      %p44 = scmp.ne.s32.totalorder %s29, %s43
      %p45 = scmp.eq.s32.totalorder %s24, 0
      %p46 = por %p44, %p45
      %s48 = sadd.s32 %s47, 1
      %p51 = scmp.eq.s32.totalorder %s18, 2
      %p52 = scmp.ne.s32.totalorder %s47, %s49
      %p53 = scmp.eq.s32.totalorder %s18, 0
      %p54 = por %p52, %p53
      %p55 = scmp.ne.s32.totalorder %s47, %s49
      %p56 = scmp.eq.s32.totalorder %s23, 2
      %p57 = por %p55, %p56
      %p58 = scmp.ne.s32.totalorder %s49, %s50
      %p59 = scmp.eq.s32.totalorder %s23, 0
      %p60 = por %p58, %p59
      %p61 = scmp.ne.s32.totalorder %s49, %s50
      %p62 = scmp.eq.s32.totalorder %s24, 2
      %p63 = por %p61, %p62
      %p65 = scmp.ne.s32.totalorder %s50, %s64
      %p66 = scmp.eq.s32.totalorder %s24, 0
      %p67 = por %p65, %p66
      %s69 = sadd.s32 %s68, 1
      %p72 = scmp.eq.s32.totalorder %s18, 2
      %p73 = scmp.ne.s32.totalorder %s68, %s70
      %p74 = scmp.eq.s32.totalorder %s18, 0
      %p75 = por %p73, %p74
      %p76 = scmp.ne.s32.totalorder %s68, %s70
      %p77 = scmp.eq.s32.totalorder %s23, 2
      %p78 = por %p76, %p77
      %p79 = scmp.ne.s32.totalorder %s70, %s71
      %p80 = scmp.eq.s32.totalorder %s23, 0
      %p81 = por %p79, %p80
      %p82 = scmp.ne.s32.totalorder %s70, %s71
      %p83 = scmp.eq.s32.totalorder %s24, 2
      %p84 = por %p82, %p83
      %p86 = scmp.ne.s32.totalorder %s71, %s85
      %p87 = scmp.eq.s32.totalorder %s24, 0
      %p88 = por %p86, %p87
      %s90 = sadd.s32 %s89, 1
      %p93 = scmp.eq.s32.totalorder %s18, 2
      %p94 = scmp.ne.s32.totalorder %s89, %s91
      %p95 = scmp.eq.s32.totalorder %s18, 0
      %p96 = por %p94, %p95
      %p97 = scmp.ne.s32.totalorder %s89, %s91
      %p98 = scmp.eq.s32.totalorder %s23, 2
      %p99 = por %p97, %p98
      %p100 = scmp.ne.s32.totalorder %s91, %s92
      %p101 = scmp.eq.s32.totalorder %s23, 0
      %p102 = por %p100, %p101
      %p103 = scmp.ne.s32.totalorder %s91, %s92
      %p104 = scmp.eq.s32.totalorder %s24, 2
      %p105 = por %p103, %p104
      %p107 = scmp.ne.s32.totalorder %s92, %s106
      %p108 = scmp.eq.s32.totalorder %s24, 0
      %p109 = por %p107, %p108
      %s111 = sadd.s32 %s110, 1
      %p114 = scmp.eq.s32.totalorder %s18, 2
      %p115 = scmp.ne.s32.totalorder %s110, %s112
      %p116 = scmp.eq.s32.totalorder %s18, 0
      %p117 = por %p115, %p116
      %p118 = scmp.ne.s32.totalorder %s110, %s112
      %p119 = scmp.eq.s32.totalorder %s23, 2
      %p120 = por %p118, %p119
      %p121 = scmp.ne.s32.totalorder %s112, %s113
      %p122 = scmp.eq.s32.totalorder %s23, 0
      %p123 = por %p121, %p122
      %p124 = scmp.ne.s32.totalorder %s112, %s113
      %p125 = scmp.eq.s32.totalorder %s24, 2
      %p126 = por %p124, %p125
      %p128 = scmp.ne.s32.totalorder %s113, %s127
      %p129 = scmp.eq.s32.totalorder %s24, 0
      %p130 = por %p128, %p129
      %s131 = ssub.s32 %s18, %s25
      %p132 = scmp.eq.s32.totalorder %s131, 0
      %s134 = sadd.s32 %s133, 1
      %s135 = scalar_select %p132, %s133, %s134
      %p138 = pneg %p132
      %p139 = scmp.eq.s32.totalorder %s18, 2
      %p140 = por %p138, %p139
      %p141 = scmp.ne.s32.totalorder %s133, %s136
      %p142 = scmp.eq.s32.totalorder %s18, 0
      %p143 = por %p141, %p142
      %p144 = scmp.ne.s32.totalorder %s133, %s136
      %p145 = scmp.eq.s32.totalorder %s23, 2
      %p146 = por %p144, %p145
      %p147 = scmp.ne.s32.totalorder %s136, %s137
      %p148 = scmp.eq.s32.totalorder %s23, 0
      %p149 = por %p147, %p148
      %p150 = scmp.ne.s32.totalorder %s136, %s137
      %p151 = scmp.eq.s32.totalorder %s24, 2
      %p152 = por %p150, %p151
      %p154 = scmp.ne.s32.totalorder %s137, %s153
      %p155 = scmp.eq.s32.totalorder %s24, 0
      %p156 = por %p154, %p155
      %s157 = ssub.s32 %s18, %s25
      %p158 = scmp.eq.s32.totalorder %s157, 0
      %s160 = sadd.s32 %s159, 1
      %s161 = scalar_select %p158, %s159, %s160
      %p164 = pneg %p158
      %p165 = scmp.eq.s32.totalorder %s18, 2
      %p166 = por %p164, %p165
      %p167 = scmp.ne.s32.totalorder %s159, %s162
      %p168 = scmp.eq.s32.totalorder %s18, 0
      %p169 = por %p167, %p168
      %p170 = scmp.ne.s32.totalorder %s159, %s162
      %p171 = scmp.eq.s32.totalorder %s23, 2
      %p172 = por %p170, %p171
      %p173 = scmp.ne.s32.totalorder %s162, %s163
      %p174 = scmp.eq.s32.totalorder %s23, 0
      %p175 = por %p173, %p174
      %p176 = scmp.ne.s32.totalorder %s162, %s163
      %p177 = scmp.eq.s32.totalorder %s24, 2
      %p178 = por %p176, %p177
      %p180 = scmp.ne.s32.totalorder %s163, %s179
      %p181 = scmp.eq.s32.totalorder %s24, 0
      %p182 = por %p180, %p181
      %s184 = sadd.s32 %s183, 1
      %p187 = scmp.eq.s32.totalorder %s18, 2
      %p188 = scmp.ne.s32.totalorder %s183, %s185
      %p189 = scmp.eq.s32.totalorder %s18, 0
      %p190 = por %p188, %p189
      %p191 = scmp.ne.s32.totalorder %s183, %s185
      %p192 = scmp.eq.s32.totalorder %s23, 2
      %p193 = por %p191, %p192
      %p194 = scmp.ne.s32.totalorder %s185, %s186
      %p195 = scmp.eq.s32.totalorder %s23, 0
      %p196 = por %p194, %p195
      %p197 = scmp.ne.s32.totalorder %s185, %s186
      %p198 = scmp.eq.s32.totalorder %s24, 2
      %p199 = por %p197, %p198
      %p201 = scmp.ne.s32.totalorder %s186, %s200
      %p202 = scmp.eq.s32.totalorder %s24, 0
      %p203 = por %p201, %p202
      %s204 = ssub.s32 %s18, %s25
      %p205 = scmp.eq.s32.totalorder %s204, 0
      %s207 = sadd.s32 %s206, 1
      %s208 = scalar_select %p205, %s206, %s207
      %p211 = pneg %p205
      %p212 = scmp.eq.s32.totalorder %s18, 2
      %p213 = por %p211, %p212
      %p214 = scmp.ne.s32.totalorder %s206, %s209
      %p215 = scmp.eq.s32.totalorder %s18, 0
      %p216 = por %p214, %p215
      %p217 = scmp.ne.s32.totalorder %s206, %s209
      %p218 = scmp.eq.s32.totalorder %s23, 2
      %p219 = por %p217, %p218
      %p220 = scmp.ne.s32.totalorder %s209, %s210
      %p221 = scmp.eq.s32.totalorder %s23, 0
      %p222 = por %p220, %p221
      %p223 = scmp.ne.s32.totalorder %s209, %s210
      %p224 = scmp.eq.s32.totalorder %s24, 2
      %p225 = por %p223, %p224
      %p227 = scmp.ne.s32.totalorder %s210, %s226
      %p228 = scmp.eq.s32.totalorder %s24, 0
      %p229 = por %p227, %p228
      %p230 = scmp.le.s32.totalorder 1, %s18
      %p231 = scmp.lt.s32.totalorder %s18, 4
      %p232 = pnand %p230, %p231
      %p233 = pneg %p232
      // Predicated region
      $region9: #{_lambda_.1} parent=5 // pred_check
        _
      $region10: #{_lambda_.1} parent=5 // pred_check_branch
        %235 = sbr.rel (%p232) target = $region12
      $region11: #{_lambda_.1} parent=5 // pred_region
        %s236 = ssub.s32 %s18, 1
        // Predicated region
        $region13: #{_lambda_.1} parent=11 // pred_check
          %p237 = pneg %p39
        $region14: #{_lambda_.1} parent=11 // pred_check_branch
          %239 = sbr.rel (%p237) target = $region16
        $region15: #{_lambda_.1} parent=11 // pred_region
          _
        $region16: #{_lambda_.1} parent=11 // pred_fallthru
          _
        // Predicated region
        $region17: #{_lambda_.1} parent=11 // pred_check
          %p240 = pneg %p60
        $region18: #{_lambda_.1} parent=11 // pred_check_branch
          %242 = sbr.rel (%p240) target = $region20
        $region19: #{_lambda_.1} parent=11 // pred_region
          _
        $region20: #{_lambda_.1} parent=11 // pred_fallthru
          _
        // Predicated region
        $region21: #{_lambda_.1} parent=11 // pred_check
          %p243 = pneg %p81
        $region22: #{_lambda_.1} parent=11 // pred_check_branch
          %245 = sbr.rel (%p243) target = $region24
        $region23: #{_lambda_.1} parent=11 // pred_region
          _
        $region24: #{_lambda_.1} parent=11 // pred_fallthru
          _
        // Predicated region
        $region25: #{_lambda_.1} parent=11 // pred_check
          %p246 = pneg %p102
        $region26: #{_lambda_.1} parent=11 // pred_check_branch
          %248 = sbr.rel (%p246) target = $region28
        $region27: #{_lambda_.1} parent=11 // pred_region
          _
        $region28: #{_lambda_.1} parent=11 // pred_fallthru
          _
        // Predicated region
        $region29: #{_lambda_.1} parent=11 // pred_check
          %p249 = pneg %p123
        $region30: #{_lambda_.1} parent=11 // pred_check_branch
          %251 = sbr.rel (%p249) target = $region32
        $region31: #{_lambda_.1} parent=11 // pred_region
          _
        $region32: #{_lambda_.1} parent=11 // pred_fallthru
          _
        // Predicated region
        $region33: #{_lambda_.1} parent=11 // pred_check
          %p252 = pneg %p196
        $region34: #{_lambda_.1} parent=11 // pred_check_branch
          %254 = sbr.rel (%p252) target = $region36
        $region35: #{_lambda_.1} parent=11 // pred_region
          _
        $region36: #{_lambda_.1} parent=11 // pred_fallthru
          _
      $region12: #{_lambda_.1} parent=5 // pred_fallthru
        _
      %p255 = scmp.lt.s32.totalorder %s18, 3
      // Predicated region
      $region37: #{_lambda_.1} parent=5 // pred_check
        %p256 = pneg %p255
      $region38: #{_lambda_.1} parent=5 // pred_check_branch
        %258 = sbr.rel (%p256) target = $region40
      $region39: #{_lambda_.1} parent=5 // pred_region
        // Predicated region
        $region41: #{_lambda_.1} parent=39 // pred_check
          %p259 = pneg %p143
        $region42: #{_lambda_.1} parent=39 // pred_check_branch
          %261 = sbr.rel (%p259) target = $region44
        $region43: #{_lambda_.1} parent=39 // pred_region
          %s262 = sand.u32 %s133, 1
          %s263 = sand.u32 %s133, 1
          %s264 = smul.addr %s263, 64
          %s265 = scalar_lea.vmem [#allocation3], %s264
          %s266 = smul.addr %s18, 8
          %s267 = scalar_lea.vmem %s5, %s266
          // Predicated region
          $region45: #{_lambda_.1} parent=43 // pred_check
            _
          $region46: #{_lambda_.1} parent=43 // pred_check_branch
            %269 = sbr.rel (0) target = $region48
          $region47: #{_lambda_.1} parent=43 // pred_region
            // Predicated region
            $region49: #{_lambda_.1} parent=47 // pred_check
              _
            $region50: #{_lambda_.1} parent=47 // pred_check_branch
              %271 = sbr.rel (0) target = $region52
            $region51: #{_lambda_.1} parent=47 // pred_region
              // Predicated region
              $region64: #{_lambda_.1} parent=51 // pred_check
                _
              $region65: #{_lambda_.1} parent=51 // pred_check_branch
                %301 = sbr.rel (0) target = $region67
              $region66: #{_lambda_.1} parent=51 // pred_region
                loop: start=0, step=1, limit=1
                $region68: #{_lambda_.1} parent=66 // loop_pre_header
                  _
                $region69: #{_lambda_.1} parent=66 // loop_header
                  %s303 = sphi 0, %s307
                  %p304 = scmp.ge.s32.totalorder %s303, 1
                  %s308 = sphi %s267, %s267
                  %s309 = sphi %s265, %s265
                $region70: #{_lambda_.1} parent=66 // loop_header_branch
                  %306 = sbr.rel (%p304) target = $region74
                $region71: #{_lambda_.1} parent=66 // loop_body
                  %v310 = vld [vmem:[%s308] sm:$0xff]
                  %311 = vst [vmem:[%s309] sm:$0xff] %v310
                  %v312 = vld [vmem:[%s308 + $0x18] sm:$0xff]
                  %313 = vst [vmem:[%s309 + $0x8] sm:$0xff] %v312
                  %v314 = vld [vmem:[%s308 + $0x30] sm:$0xff]
                  %315 = vst [vmem:[%s309 + $0x10] sm:$0xff] %v314
                  %v316 = vld [vmem:[%s308 + $0x48] sm:$0xff]
                  %317 = vst [vmem:[%s309 + $0x18] sm:$0xff] %v316
                  %v318 = vld [vmem:[%s308 + $0x60] sm:$0xff]
                  %319 = vst [vmem:[%s309 + $0x20] sm:$0xff] %v318
                  %v320 = vld [vmem:[%s308 + $0x78] sm:$0xff]
                  %321 = vst [vmem:[%s309 + $0x28] sm:$0xff] %v320
                  %v322 = vld [vmem:[%s308 + $0x90] sm:$0xff]
                  %323 = vst [vmem:[%s309 + $0x30] sm:$0xff] %v322
                  %v324 = vld [vmem:[%s308 + $0xa8] sm:$0xff]
                  %325 = vst [vmem:[%s309 + $0x38] sm:$0xff] %v324
                $region72: #{_lambda_.1} parent=66 // loop_footer
                  %s307 = sadd.s32 1, %s303
                $region73: #{_lambda_.1} parent=66 // loop_footer_branch
                  %302 = sbr.rel target = $region69
                $region74: #{_lambda_.1} parent=66 // loop_exit
                  _
              $region67: #{_lambda_.1} parent=51 // pred_fallthru
                _
              // Predicated region
              $region75: #{_lambda_.1} parent=51 // pred_check
                _
              $region76: #{_lambda_.1} parent=51 // pred_check_branch
                %327 = sbr.rel target = $region78
              $region77: #{_lambda_.1} parent=51 // pred_region
                _
              $region78: #{_lambda_.1} parent=51 // pred_fallthru
                _
            $region52: #{_lambda_.1} parent=47 // pred_fallthru
              _
            // Predicated region
            $region53: #{_lambda_.1} parent=47 // pred_check
              _
            $region54: #{_lambda_.1} parent=47 // pred_check_branch
              %273 = sbr.rel target = $region56
            $region55: #{_lambda_.1} parent=47 // pred_region
              %s275 = ssub.s32 256, 1
              loop: start=0, step=1, limit=1
              $region57: #{_lambda_.1} parent=55 // loop_pre_header
                _
              $region58: #{_lambda_.1} parent=55 // loop_header
                %s277 = sphi 0, %s281
                %p278 = scmp.ge.s32.totalorder %s277, 1
                %s282 = sphi %s267, %s267
                %s283 = sphi %s265, %s265
              $region59: #{_lambda_.1} parent=55 // loop_header_branch
                %280 = sbr.rel (%p278) target = $region63
              $region60: #{_lambda_.1} parent=55 // loop_body
                %v284 = vld [vmem:[%s282] sm:%s275]
                %285 = vst [vmem:[%s283] sm:%s275] %v284
                %v286 = vld [vmem:[%s282 + $0x18] sm:%s275]
                %287 = vst [vmem:[%s283 + $0x8] sm:%s275] %v286
                %v288 = vld [vmem:[%s282 + $0x30] sm:%s275]
                %289 = vst [vmem:[%s283 + $0x10] sm:%s275] %v288
                %v290 = vld [vmem:[%s282 + $0x48] sm:%s275]
                %291 = vst [vmem:[%s283 + $0x18] sm:%s275] %v290
                %v292 = vld [vmem:[%s282 + $0x60] sm:%s275]
                %293 = vst [vmem:[%s283 + $0x20] sm:%s275] %v292
                %v294 = vld [vmem:[%s282 + $0x78] sm:%s275]
                %295 = vst [vmem:[%s283 + $0x28] sm:%s275] %v294
                %v296 = vld [vmem:[%s282 + $0x90] sm:%s275]
                %297 = vst [vmem:[%s283 + $0x30] sm:%s275] %v296
                %v298 = vld [vmem:[%s282 + $0xa8] sm:%s275]
                %299 = vst [vmem:[%s283 + $0x38] sm:%s275] %v298
              $region61: #{_lambda_.1} parent=55 // loop_footer
                %s281 = sadd.s32 1, %s277
              $region62: #{_lambda_.1} parent=55 // loop_footer_branch
                %276 = sbr.rel target = $region58
              $region63: #{_lambda_.1} parent=55 // loop_exit
                _
            $region56: #{_lambda_.1} parent=47 // pred_fallthru
              _
          $region48: #{_lambda_.1} parent=43 // pred_fallthru
            _
          %328 = vnop
        $region44: #{_lambda_.1} parent=39 // pred_fallthru
          _
        // Predicated region
        $region79: #{_lambda_.1} parent=39 // pred_check
          %p329 = pneg %p169
        $region80: #{_lambda_.1} parent=39 // pred_check_branch
          %331 = sbr.rel (%p329) target = $region82
        $region81: #{_lambda_.1} parent=39 // pred_region
          %p332 = scmp.lt.s32.totalorder %s18, 2
          %s333 = scalar_select %p332, %s18, 2
          %s334 = scalar_lea.vmem %s6, %s333
        $region82: #{_lambda_.1} parent=39 // pred_fallthru
          _
      $region40: #{_lambda_.1} parent=5 // pred_fallthru
        _
      %p335 = scmp.le.s32.totalorder 1, %s18
      %p336 = scmp.lt.s32.totalorder %s18, 4
      %p337 = pnand %p335, %p336
      %p338 = pneg %p337
      // Predicated region
      $region83: #{_lambda_.1} parent=5 // pred_check
        _
      $region84: #{_lambda_.1} parent=5 // pred_check_branch
        %340 = sbr.rel (%p337) target = $region86
      $region85: #{_lambda_.1} parent=5 // pred_region
        %s341 = ssub.s32 %s18, 1
        %s342 = sand.u32 %s136, 1
        %s343 = sand.u32 %s136, 1
        %s344 = smul.addr %s343, 64
        %s345 = scalar_lea.vmem [#allocation3], %s344
        // Predicated region
        $region87: #{_lambda_.1} parent=85 // pred_check
          %p346 = pneg %p149
        $region88: #{_lambda_.1} parent=85 // pred_check_branch
          %348 = sbr.rel (%p346) target = $region90
        $region89: #{_lambda_.1} parent=85 // pred_region
          _
        $region90: #{_lambda_.1} parent=85 // pred_fallthru
          _
        %p349 = pneg %p39
        %p350 = pneg %p36
        %p351 = pneg %p60
        %p352 = pneg %p57
        %p353 = pneg %p81
        %p354 = pneg %p78
        %p355 = pneg %p102
        %p356 = pneg %p99
        %p357 = pneg %p123
        %p358 = pneg %p120
        %s359 = sand.u32 %s136, 1
        %s360 = sand.u32 %s136, 1
        %s361 = smul.addr %s360, 64
        %s362 = scalar_lea.vmem [#allocation3], %s361
        %p363 = pneg %p149
        %p364 = pneg %p146
        %p365 = scmp.lt.s32.totalorder %s23, 2
        %s366 = scalar_select %p365, %s23, 2
        %s367 = scalar_lea.vmem %s6, %s366
        %p368 = pneg %p175
        %p369 = pneg %p172
        %p370 = pneg %p196
        %p371 = pneg %p193
        %p372 = pneg %p222
        %p373 = pneg %p219
        %s374 = sand.u32 %s209, 1
        %s375 = scalar_lea.sflag [#allocation5], %s374
        %s376 = sand.u32 %s209, 1
        %s377 = smul.addr %s376, 8
        %s378 = scalar_lea.vmem [#allocation4], %s377
        %p379 = scmp.lt.s32.totalorder %s23, 2
        %s380 = scalar_select %p379, %s23, 2
        %s381 = scalar_lea.vmem %s6, %s380
        %v382 = vld [vmem:[%s0] sm:$0xff]
        %v383 = vld [vmem:[%s1] sm:$0xff]
        %v384 = vld [vmem:[%s2] sm:$0x1]
        %v386 = vlaneseq
        %v387 = vshrl.u32 %v386, 7
        %v388 = vsub.s32 0, %v387
        %v389 = vrot.slane %v384, %v388
        %vm391 = vcmask 64512
        %v393 = vsel %vm391, %v382, 0
        %395 = vmatprep.subr.mxu0 0.0
        %396 = vmatpush1.msra.mxu0 0.0
        %397 = vmatprep.subr.mxu0 0.0
        %398 = vmatpush1.msra.mxu0 0.0
        %399 = vmatprep.subr.mxu0 0.0
        %400 = vmatpush1.msra.mxu0 0.0
        %401 = vmatprep.subr.mxu0 0.0
        %402 = vmatpush1.msra.mxu0 0.0
        %403 = vmatprep.subr.mxu0 0.0
        %404 = vmatpush1.msra.mxu0 0.0
        %405 = vmatprep.subr.mxu0 0.0
        %406 = vmatpush1.msra.mxu0 0.0
        %407 = vmatprep.subr.mxu0 0.0
        %408 = vmatpush1.msra.mxu0 0.0
        %409 = vmatprep.subr.mxu0 0.0
        %410 = vmatpush1.msra.mxu0 0.0
        %411 = vmatprep.subr.mxu0 0.0
        %412 = vmatpush1.msra.mxu0 0.0
        %413 = vmatprep.subr.mxu0 0.0
        %414 = vmatpush1.msra.mxu0 0.0
        %415 = vmatprep.subr.mxu0 0.0
        %416 = vmatpush1.msra.mxu0 0.0
        %417 = vmatprep.subr.mxu0 0.0
        %418 = vmatpush1.msra.mxu0 0.0
        %419 = vmatprep.subr.mxu0 0.0
        %420 = vmatpush1.msra.mxu0 0.0
        %421 = vmatprep.subr.mxu0 0.0
        %422 = vmatpush1.msra.mxu0 0.0
        %423 = vmatprep.subr.mxu0 0.0
        %424 = vmatpush1.msra.mxu0 0.0
        %425 = vmatprep.subr.mxu0 0.0
        %426 = vmatpush1.msra.mxu0 %v383
        %427 = vmatprep.subr.mxu0 0.0
        %428 = vmatpush2.msra.mxu0 0.0
        %429 = vmatprep.subr.mxu0 0.0
        %430 = vmatpush2.msra.mxu0 0.0
        %431 = vmatprep.subr.mxu0 0.0
        %432 = vmatpush2.msra.mxu0 0.0
        %433 = vmatprep.subr.mxu0 0.0
        %434 = vmatpush2.msra.mxu0 0.0
        %435 = vmatprep.subr.mxu0 0.0
        %436 = vmatpush2.msra.mxu0 0.0
        %437 = vmatprep.subr.mxu0 0.0
        %438 = vmatpush2.msra.mxu0 0.0
        %439 = vmatprep.subr.mxu0 0.0
        %440 = vmatpush2.msra.mxu0 0.0
        %441 = vmatprep.subr.mxu0 0.0
        %442 = vmatpush2.msra.mxu0 0.0
        %443 = vmatprep.subr.mxu0 0.0
        %444 = vmatpush2.msra.mxu0 0.0
        %445 = vmatprep.subr.mxu0 0.0
        %446 = vmatpush2.msra.mxu0 0.0
        %447 = vmatprep.subr.mxu0 0.0
        %448 = vmatpush2.msra.mxu0 0.0
        %449 = vmatprep.subr.mxu0 0.0
        %450 = vmatpush2.msra.mxu0 0.0
        %451 = vmatprep.subr.mxu0 0.0
        %452 = vmatpush2.msra.mxu0 0.0
        %453 = vmatprep.subr.mxu0 0.0
        %454 = vmatpush2.msra.mxu0 0.0
        %455 = vmatprep.subr.mxu0 0.0
        %456 = vmatpush2.msra.mxu0 0.0
        %457 = vmatprep.subr.mxu0 0.0
        %458 = vmatpush2.msra.mxu0 0.0
        %459 = vmatprep.mubr.f32.mxu0 0.0
        %460 = vmatmul.mubr.f32.gmra.mxu0 %v393
        %v461 = vpop.f32.mrf.mxu0
        %v462 = vadd.f32 %v389, %v461
        %v463 = vpop.f32.mrf.mxu0
        %464 = vdwg.mxu0
        %v465 = vmax.f32 %v462, 0.0
        %v466 = vld [vmem:[%s3] sm:$0xff]
        %v467 = vld [vmem:[%s3 + $0x8] sm:$0xff]
        %v468 = vld [vmem:[%s3 + $0x10] sm:$0xff]
        %v469 = vld [vmem:[%s3 + $0x18] sm:$0xff]
        %v470 = vld [vmem:[%s4] sm:$0x1]
        %v472 = vlaneseq
        %v473 = vshrl.u32 %v472, 7
        %v474 = vsub.s32 0, %v473
        %v475 = vrot.slane %v470, %v474
        %vm477 = vcmask 261120
        %v479 = vsel %vm477, %v465, 0
        %481 = vmatprep.subr.mxu0 0.0
        %482 = vmatpush1.msra.mxu0 0.0
        %483 = vmatprep.subr.mxu0 0.0
        %484 = vmatpush1.msra.mxu0 0.0
        %485 = vmatprep.subr.mxu0 0.0
        %486 = vmatpush1.msra.mxu0 0.0
        %487 = vmatprep.subr.mxu0 0.0
        %488 = vmatpush1.msra.mxu0 0.0
        %489 = vmatprep.subr.mxu0 0.0
        %490 = vmatpush1.msra.mxu0 0.0
        %491 = vmatprep.subr.mxu0 0.0
        %492 = vmatpush1.msra.mxu0 0.0
        %493 = vmatprep.subr.mxu0 0.0
        %494 = vmatpush1.msra.mxu0 0.0
        %495 = vmatprep.subr.mxu0 0.0
        %496 = vmatpush1.msra.mxu0 0.0
        %497 = vmatprep.subr.mxu0 0.0
        %498 = vmatpush1.msra.mxu0 0.0
        %499 = vmatprep.subr.mxu0 0.0
        %500 = vmatpush1.msra.mxu0 0.0
        %501 = vmatprep.subr.mxu0 0.0
        %502 = vmatpush1.msra.mxu0 0.0
        %503 = vmatprep.subr.mxu0 0.0
        %504 = vmatpush1.msra.mxu0 0.0
        %505 = vmatprep.subr.mxu0 0.0
        %506 = vmatpush1.msra.mxu0 %v469
        %507 = vmatprep.subr.mxu0 0.0
        %508 = vmatpush1.msra.mxu0 %v468
        %509 = vmatprep.subr.mxu0 0.0
        %510 = vmatpush1.msra.mxu0 %v467
        %511 = vmatprep.subr.mxu0 0.0
        %512 = vmatpush1.msra.mxu0 %v466
        %513 = vmatprep.subr.mxu0 0.0
        %514 = vmatpush2.msra.mxu0 0.0
        %515 = vmatprep.subr.mxu0 0.0
        %516 = vmatpush2.msra.mxu0 0.0
        %517 = vmatprep.subr.mxu0 0.0
        %518 = vmatpush2.msra.mxu0 0.0
        %519 = vmatprep.subr.mxu0 0.0
        %520 = vmatpush2.msra.mxu0 0.0
        %521 = vmatprep.subr.mxu0 0.0
        %522 = vmatpush2.msra.mxu0 0.0
        %523 = vmatprep.subr.mxu0 0.0
        %524 = vmatpush2.msra.mxu0 0.0
        %525 = vmatprep.subr.mxu0 0.0
        %526 = vmatpush2.msra.mxu0 0.0
        %527 = vmatprep.subr.mxu0 0.0
        %528 = vmatpush2.msra.mxu0 0.0
        %529 = vmatprep.subr.mxu0 0.0
        %530 = vmatpush2.msra.mxu0 0.0
        %531 = vmatprep.subr.mxu0 0.0
        %532 = vmatpush2.msra.mxu0 0.0
        %533 = vmatprep.subr.mxu0 0.0
        %534 = vmatpush2.msra.mxu0 0.0
        %535 = vmatprep.subr.mxu0 0.0
        %536 = vmatpush2.msra.mxu0 0.0
        %537 = vmatprep.subr.mxu0 0.0
        %538 = vmatpush2.msra.mxu0 0.0
        %539 = vmatprep.subr.mxu0 0.0
        %540 = vmatpush2.msra.mxu0 0.0
        %541 = vmatprep.subr.mxu0 0.0
        %542 = vmatpush2.msra.mxu0 0.0
        %543 = vmatprep.subr.mxu0 0.0
        %544 = vmatpush2.msra.mxu0 0.0
        %545 = vmatprep.mubr.f32.mxu0 0.0
        %546 = vmatmul.mubr.f32.gmra.mxu0 %v479
        %v547 = vpop.f32.mrf.mxu0
        %v548 = vadd.f32 %v475, %v547
        %v549 = vpop.f32.mrf.mxu0
        %550 = vdwg.mxu0
        %v551 = vtanh.pop %v548
        %v552 = vld [vmem:[%s345] sm:$0xff]
        %v553 = vld [vmem:[%s345 + $0x8] sm:$0xff]
        %v554 = vld [vmem:[%s345 + $0x10] sm:$0xff]
        %v555 = vld [vmem:[%s345 + $0x18] sm:$0xff]
        %v556 = vld [vmem:[%s345 + $0x20] sm:$0xff]
        %v557 = vld [vmem:[%s345 + $0x28] sm:$0xff]
        %v558 = vld [vmem:[%s345 + $0x30] sm:$0xff]
        %v559 = vld [vmem:[%s345 + $0x38] sm:$0xff]
        %v560 = vld [vmem:[%s381] sm:$0x1]
        %v562 = vlaneseq
        %v563 = vshrl.u32 %v562, 7
        %v564 = vsub.s32 0, %v563
        %v565 = vrot.slane %v560, %v564
        %vm567 = vcmask 523264
        %v569 = vsel %vm567, %v551, 0
        %571 = vmatprep.subr.mxu0 0.0
        %572 = vmatpush1.msra.mxu0 0.0
        %573 = vmatprep.subr.mxu0 0.0
        %574 = vmatpush1.msra.mxu0 0.0
        %575 = vmatprep.subr.mxu0 0.0
        %576 = vmatpush1.msra.mxu0 0.0
        %577 = vmatprep.subr.mxu0 0.0
        %578 = vmatpush1.msra.mxu0 0.0
        %579 = vmatprep.subr.mxu0 0.0
        %580 = vmatpush1.msra.mxu0 0.0
        %581 = vmatprep.subr.mxu0 0.0
        %582 = vmatpush1.msra.mxu0 0.0
        %583 = vmatprep.subr.mxu0 0.0
        %584 = vmatpush1.msra.mxu0 0.0
        %585 = vmatprep.subr.mxu0 0.0
        %586 = vmatpush1.msra.mxu0 0.0
        %587 = vmatprep.subr.mxu0 0.0
        %588 = vmatpush1.msra.mxu0 %v559
        %589 = vmatprep.subr.mxu0 0.0
        %590 = vmatpush1.msra.mxu0 %v558
        %591 = vmatprep.subr.mxu0 0.0
        %592 = vmatpush1.msra.mxu0 %v557
        %593 = vmatprep.subr.mxu0 0.0
        %594 = vmatpush1.msra.mxu0 %v556
        %595 = vmatprep.subr.mxu0 0.0
        %596 = vmatpush1.msra.mxu0 %v555
        %597 = vmatprep.subr.mxu0 0.0
        %598 = vmatpush1.msra.mxu0 %v554
        %599 = vmatprep.subr.mxu0 0.0
        %600 = vmatpush1.msra.mxu0 %v553
        %601 = vmatprep.subr.mxu0 0.0
        %602 = vmatpush1.msra.mxu0 %v552
        %603 = vmatprep.subr.mxu0 0.0
        %604 = vmatpush2.msra.mxu0 0.0
        %605 = vmatprep.subr.mxu0 0.0
        %606 = vmatpush2.msra.mxu0 0.0
        %607 = vmatprep.subr.mxu0 0.0
        %608 = vmatpush2.msra.mxu0 0.0
        %609 = vmatprep.subr.mxu0 0.0
        %610 = vmatpush2.msra.mxu0 0.0
        %611 = vmatprep.subr.mxu0 0.0
        %612 = vmatpush2.msra.mxu0 0.0
        %613 = vmatprep.subr.mxu0 0.0
        %614 = vmatpush2.msra.mxu0 0.0
        %615 = vmatprep.subr.mxu0 0.0
        %616 = vmatpush2.msra.mxu0 0.0
        %617 = vmatprep.subr.mxu0 0.0
        %618 = vmatpush2.msra.mxu0 0.0
        %619 = vmatprep.subr.mxu0 0.0
        %620 = vmatpush2.msra.mxu0 0.0
        %621 = vmatprep.subr.mxu0 0.0
        %622 = vmatpush2.msra.mxu0 0.0
        %623 = vmatprep.subr.mxu0 0.0
        %624 = vmatpush2.msra.mxu0 0.0
        %625 = vmatprep.subr.mxu0 0.0
        %626 = vmatpush2.msra.mxu0 0.0
        %627 = vmatprep.subr.mxu0 0.0
        %628 = vmatpush2.msra.mxu0 0.0
        %629 = vmatprep.subr.mxu0 0.0
        %630 = vmatpush2.msra.mxu0 0.0
        %631 = vmatprep.subr.mxu0 0.0
        %632 = vmatpush2.msra.mxu0 0.0
        %633 = vmatprep.subr.mxu0 0.0
        %634 = vmatpush2.msra.mxu0 0.0
        %635 = vmatprep.mubr.f32.mxu0 0.0
        %636 = vmatmul.mubr.f32.gmra.mxu0 %v569
        %v637 = vpop.f32.mrf.mxu0
        %v638 = vadd.f32 %v565, %v637
        %v639 = vpop.f32.mrf.mxu0
        %640 = vdwg.mxu0
        %s641 = sld [smem:[#allocation2]]
        %v642 = vstv %s641
        %v643 = vmul.f32 %v638, %v642
        %644 = vst [vmem:[%s378] sm:$0xff] %v643
        %s645 = sand.u32 %s209, 1
        %s646 = scalar_lea.sflag [#allocation5], %s645
        %s647 = sand.u32 %s209, 1
        %s648 = smul.addr %s647, 8
        %s649 = scalar_lea.vmem [#allocation4], %s648
        // Predicated region
        $region91: #{_lambda_.1} parent=85 // pred_check
          %p650 = pneg %p219
        $region92: #{_lambda_.1} parent=85 // pred_check_branch
          %652 = sbr.rel (%p650) target = $region94
        $region93: #{_lambda_.1} parent=85 // pred_region
          %s654 = ssub.s32 128, 128
          %655 = vsyncadd %s646, %s654
          %s656 = smul.addr %s23, 128
          %s657 = scalar_lea.hbm %s8, %s656
          %s659 = sshll.u32 %s649, 4
          %s660 = int_to_ptr.vmem [resolvable:$true] %s659
          %662 = dma.vmem_to_hbm [thread:$0]  %s660, 128, %s657, %s646
        $region94: #{_lambda_.1} parent=85 // pred_fallthru
          _
      $region86: #{_lambda_.1} parent=5 // pred_fallthru
        _
      %p663 = scmp.le.s32.totalorder 2, %s18
      // Predicated region
      $region95: #{_lambda_.1} parent=5 // pred_check
        %p664 = pneg %p663
      $region96: #{_lambda_.1} parent=5 // pred_check_branch
        %666 = sbr.rel (%p664) target = $region98
      $region97: #{_lambda_.1} parent=5 // pred_region
        %s667 = ssub.s32 %s18, 2
        // Predicated region
        $region99: #{_lambda_.1} parent=97 // pred_check
          %p668 = pneg %p225
        $region100: #{_lambda_.1} parent=97 // pred_check_branch
          %670 = sbr.rel (%p668) target = $region102
        $region101: #{_lambda_.1} parent=97 // pred_region
          %s671 = sand.u32 %s210, 1
          %s672 = scalar_lea.sflag [#allocation5], %s671
          %s673 = sand.u32 %s210, 1
          %s674 = smul.addr %s673, 8
          %s675 = scalar_lea.vmem [#allocation4], %s674
          %676 = dma.done %s672, 128
        $region102: #{_lambda_.1} parent=97 // pred_fallthru
          _
      $region98: #{_lambda_.1} parent=5 // pred_fallthru
        _
    $region6: #{_lambda_.1} parent=1 // loop_footer
      %s22 = sadd.s32 1, %s18
    $region7: #{_lambda_.1} parent=1 // loop_footer_branch
      %17 = sbr.rel target = $region3
    $region8: #{_lambda_.1} parent=1 // loop_exit
      _
    %677 = vsyncpa [#allocation5], 1
    %s678 = scalar_lea.sflag [#allocation5], 1
    %679 = vsyncpa %s678, 1

</llo_original>
